<compile_context>
chip_gen: v5e
topology: v5e:2x2
jax: 0.10.0
libtpu: 0.0.40
codegen_flags: <defaults>
</compile_context>

<pallas_src>
import functools

import jax
import jax.numpy as jnp
from jax.experimental import pallas as pl
from jax.experimental.pallas import tpu as pltpu

_LANE = 128
_SUBLANE = 8


def _get_number_of_instances(k, n):
    # Mirrors WeldonPool2dFunction.get_number_of_instances (static Python).
    if k <= 0:
        return 0
    elif k < 1:
        return int(round(k * n))
    elif k > n:
        return int(n)
    else:
        return int(k)


def _extract_top_sum(work, k, col):
    """Sum of the k largest values per row via iterative extraction (k > 1).

    Only uses lane max/min reductions and elementwise selects (no argmax, no
    1-D intermediates).  Duplicates are handled: exactly one occurrence (the
    lowest column index) is retired per step.  Uses -inf sentinels, so rows
    already containing +/-inf can be mis-counted for k > 1 (inherent to any
    mask-and-extract scheme); fine for ordinary activations.
    """
    R, N = work.shape
    total = jnp.zeros((R, 1), jnp.float32)
    for _ in range(k):  # k is a small static int -> fully unrolled
        cur = jnp.max(work, axis=-1, keepdims=True)
        total = total + cur
        # first column where work == cur
        hit = jnp.min(jnp.where(work == cur, col, N), axis=-1, keepdims=True)
        work = jnp.where(col == hit, -jnp.inf, work)
    return total


def _weldon_kernel(x_ref, o_ref, *, kmax, kmin, chunk):
    """One (tile_r, n) row-block in VMEM; kmax/kmin/chunk are static ints.

    The row-tile is processed in `chunk`-row strips so the f32 working copies
    and the lane-padded (R, 1) column temporaries stay small and bounded; the
    big tile_r only sizes the HBM<->VMEM pipeline buffers.
    """
    tile_r, n = x_ref.shape
    nchunks = tile_r // chunk

    need_iota = (kmax > 1) or (kmin > 1)
    # Hoisted out of the chunk loop (JAX does not CSE broadcast_in_dim).
    col = (jax.lax.broadcasted_iota(jnp.int32, (chunk, n), 1)
           if need_iota else None)

    def process(r0):
        xf = x_ref[pl.ds(r0, chunk), :].astype(jnp.float32)  # f32 compute (v5e VPU)

        if kmax == 1:
            top = jnp.max(xf, axis=-1, keepdims=True)
        else:
            top = _extract_top_sum(xf, kmax, col) * (1.0 / float(kmax))

        if kmin > 0:
            if kmin == 1:
                bot = jnp.min(xf, axis=-1, keepdims=True)
            else:
                # bottom-k of x == -(top-k of -x)
                bot = -_extract_top_sum(-xf, kmin, col) * (1.0 / float(kmin))
            res = (top + bot) * 0.5
        else:
            res = top

        # NOTE: (R, 1) column output => lane-masked stores + lane-padded output
        # buffer.  A lane-dense (1, R) layout would need a sublane->lane
        # relayout in-kernel; the output is ~1/n of the input bytes and the
        # store/write-back is hidden under the input HBM DMA, so the robust
        # column layout is kept.
        o_ref[pl.ds(r0, chunk), :] = res.astype(o_ref.dtype)

    if nchunks == 1:
        process(0)                        # static slice (== whole block)
    else:
        @pl.loop(0, nchunks)
        def _(c):
            process(pl.multiple_of(c * chunk, chunk))


def _choose_tiling(rows, n, itemsize, kmax, kmin):
    """Pick (tile_r, chunk).

    tile_r sizes the double-buffered pipeline buffers:
        2 * tile_r * lanes_pad * itemsize      (input blocks)
      + 2 * tile_r * 128 * itemsize            (output column blocks, lane-padded)
    kept under ~16 MiB (vmem_limit is raised to 32 MiB, leaving headroom for
    in-kernel temporaries and compiler scratch on every generation, including
    v7x's 64 MiB physical VMEM).  chunk bounds the per-strip f32 working set.
    """
    lanes_pad = max(-(-n // _LANE) * _LANE, _LANE)

    pipe_budget = 16 * 1024 * 1024
    per_row = 2 * (lanes_pad + _LANE) * itemsize
    tile_r = int(pipe_budget // per_row)
    tile_r = max(_SUBLANE, min(tile_r, 8192))
    tile_r = (tile_r // _SUBLANE) * _SUBLANE       # f32 sublane multiple

    rows8 = -(-rows // _SUBLANE) * _SUBLANE
    tile_r = min(tile_r, rows8)                    # don't pad far past the data

    n_tmp = 4 if (kmax > 1 or kmin > 1) else 2     # live (chunk, n) f32 copies
    tmp_budget = 2 * 1024 * 1024
    chunk_cap = max(_SUBLANE,
                    (tmp_budget // (n_tmp * lanes_pad * 4)) // _SUBLANE * _SUBLANE)
    chunk = min(256, tile_r, chunk_cap)

    tile_r = -(-tile_r // chunk) * chunk           # tile_r multiple of chunk
    return tile_r, chunk


class WeldonPool2d:
    """JAX/Pallas equivalent of the PyTorch WeldonPool2d module (forward only)."""

    def __init__(self, kmax=1, kmin=None):
        self.kmax = kmax
        self.kmin = kmin if kmin is not None else kmax
        print('Using Weldon Pooling with kmax={}, kmin={}.'.format(self.kmax, self.kmin))

    def __call__(self, x):
        B, C, H, W = x.shape
        n = H * W
        km = _get_number_of_instances(self.kmax, n)
        kn = _get_number_of_instances(self.kmin, n)
        if km < 1:
            raise ValueError(
                'WeldonPool2d: kmax={} selects no elements for n={} '
                '(the reference implementation would divide by zero).'.format(self.kmax, n))

        rows = B * C
        itemsize = jnp.dtype(x.dtype).itemsize
        tile_r, chunk = _choose_tiling(rows, n, itemsize, km, kn)
        num_tiles = pl.cdiv(rows, tile_r)

        # Contiguous reshape: free (no HBM pass).  Keep the input in its
        # original dtype through the DMA (halves HBM traffic for bf16 models);
        # the kernel casts per-chunk to f32.  Ragged last tiles are handled by
        # the pipeline's clipped boundary blocks (no jnp.pad copy); garbage in
        # the tail rows only affects out-of-bounds output rows, which are
        # dropped on write-back.
        xr = x.reshape(rows, n)

        cost = pl.CostEstimate(
            flops=int(rows * n * (km + kn + 2)),
            transcendentals=0,
            bytes_accessed=int(rows * n * itemsize + rows * itemsize))

        out = pl.pallas_call(
            functools.partial(_weldon_kernel, kmax=km, kmin=kn, chunk=chunk),
            out_shape=jax.ShapeDtypeStruct((rows, 1), x.dtype),
            grid=(num_tiles,),
            in_specs=[pl.BlockSpec((tile_r, n), lambda i: (i, 0))],
            out_specs=pl.BlockSpec((tile_r, 1), lambda i: (i, 0)),
            compiler_params=pltpu.CompilerParams(
                dimension_semantics=("parallel",),        # dual-TC sharding on v7x
                vmem_limit_bytes=32 * 1024 * 1024),
            cost_estimate=cost,
        )(xr)

        return out[:, 0].reshape(B, C)


def _reference(x, kmax, kmin):
    B, C, H, W = x.shape
    n = H * W
    km = _get_number_of_instances(kmax, n)
    kn = _get_number_of_instances(kmin, n)
    xs = jnp.sort(x.reshape(B, C, n), axis=2)[:, :, ::-1]  # descending
    out = xs[:, :, :km].sum(2) / km
    if kn > 0:
        out = (out + xs[:, :, n - kn:].sum(2) / kn) / 2
    return out.astype(x.dtype)


# TODO(synk): custom backward (WeldonPool2dFunction.backward) is not implemented;
# this is the forward pass only, matching the module's inference behavior.

if __name__ == "__main__":
    key = jax.random.PRNGKey(0)
    B, C, H, W = 2, 4, 16, 16
    x = jax.random.normal(key, (B, C, H, W), dtype=jnp.float32)

    # Default configuration (kmax=1, kmin defaults to kmax) -> fast path.
    pool = WeldonPool2d(kmax=1)
    y = jax.block_until_ready(pool(x))
    y_ref = _reference(x, pool.kmax, pool.kmin)
    assert y.shape == (B, C)
    assert jnp.allclose(y, y_ref, atol=1e-5, rtol=1e-5), "mismatch vs reference (kmax=1)"

    # Exercise the k > 1 extraction path as well.
    pool2 = WeldonPool2d(kmax=3, kmin=2)
    y2 = jax.block_until_ready(pool2(x))
    y2_ref = _reference(x, pool2.kmax, pool2.kmin)
    assert jnp.allclose(y2, y2_ref, atol=1e-5, rtol=1e-5), "mismatch vs reference (kmax=3,kmin=2)"

    print("KERNEL_OK")
</pallas_src>

<mosaic_0001>
module attributes {stable_mosaic.version = 11 : i64} {
  func.func @_weldon_kernel(%arg0: i32, %arg1: memref<8x256xf32, #tpu.memory_space<vmem>>, %arg2: memref<8x1xf32, #tpu.memory_space<vmem>>) attributes {dimension_semantics = [#tpu.dimension_semantics<parallel>], iteration_bounds = array<i64: 1>, scalar_prefetch = 0 : i64, scratch_operands = 0 : i64, tpu.core_type = #tpu.core_type<tc>, window_params = [{transform_indices = @transform_0, window_bounds = array<i64: 8, 256>}, {transform_indices = @transform_1, window_bounds = array<i64: 8, 1>}]} {
    %c0 = arith.constant 0 : index
    %c0_0 = arith.constant 0 : index
    %0 = vector.load %arg1[%c0, %c0_0] : memref<8x256xf32, #tpu.memory_space<vmem>>, vector<8x256xf32>
    %cst = arith.constant dense<0xFF800000> : vector<8xf32>
    %1 = vector.multi_reduction <maximumf>, %0, %cst [1] : vector<8x256xf32> to vector<8xf32>
    %2 = vector.shape_cast %1 : vector<8xf32> to vector<8x1xf32>
    %cst_1 = arith.constant dense<0x7F800000> : vector<8xf32>
    %3 = vector.multi_reduction <minimumf>, %0, %cst_1 [1] : vector<8x256xf32> to vector<8xf32>
    %4 = vector.shape_cast %3 : vector<8xf32> to vector<8x1xf32>
    %5 = arith.addf %2, %4 : vector<8x1xf32>
    %cst_2 = arith.constant 5.000000e-01 : f32
    %6 = vector.broadcast %cst_2 : f32 to vector<8x1xf32>
    %7 = arith.mulf %5, %6 : vector<8x1xf32>
    %c0_3 = arith.constant 0 : index
    %c0_4 = arith.constant 0 : index
    %8 = vector.load %arg2[%c0_3, %c0_4] : memref<8x1xf32, #tpu.memory_space<vmem>>, vector<8x1xf32>
    tpu.vector_store %arg2[%c0_3, %c0_4], %7 {strides = array<i32>} : memref<8x1xf32, #tpu.memory_space<vmem>>, vector<8x1xf32>,
    return
  }
  func.func @transform_0(%arg0: i32) -> (i32, i32) {
    %c0_i32 = arith.constant 0 : i32
    %c0_i32_0 = arith.constant 0 : i32
    return %arg0, %c0_i32 : i32, i32
  }
  func.func @transform_1(%arg0: i32) -> (i32, i32) {
    %c0_i32 = arith.constant 0 : i32
    %c0_i32_0 = arith.constant 0 : i32
    return %arg0, %c0_i32 : i32, i32
  }
}

</mosaic_0001>

<llo_original>
// kernel: tpu_custom_call.1
$region0: #{tpu_custom_call.1}
  #allocation0 [shape = 'u32[]', space=smem, size = 0x4, offset = 0x4, fixed_abs, tag = 'smem constant byte address 0x4 - core index']
  #allocation1 [shape = 'u32[72,128]{1,0:T(1,128)}', space=vmem, size = 0x9000, scoped, tag = 'internal scratch']
  %s0 = inlined_call_operand.hbm [shape: f32[8,256], index: 0, kind: input, shape index: {}]
  %s1 = inlined_call_operand.vmem [shape: f32[8,1], index: 1, kind: output, shape index: {}]
  %s2 = sld [smem:[#allocation0]]
  $region18: #{tpu_custom_call.1} parent=0
    _
  %s4 = ssub.s32 1, %s2
  %s5 = scalar_select 0, %s4, %s2
  $region1: #{tpu_custom_call.1} parent=0
    #allocation2 [shape = 'u8[8192]{0}', space=vmem, size = 0x2000, scoped, tag = 'input window, operand 0, single buffered']
    #allocation3 [shape = 's32[1]{0}', space=sflag, size = 0x4, scoped, tag = 'scoped memory for tpu_custom_call.1']
    %6 = vsyncpa [#allocation3], 0
    // Predicated region
    $region2: #{tpu_custom_call.1} parent=1 // pred_check
      _
    $region3: #{tpu_custom_call.1} parent=1 // pred_check_branch
      %8 = sbr.rel (0) target = $region5
    $region4: #{tpu_custom_call.1} parent=1 // pred_region
      %10 = vsyncadd [#allocation3], 0
      %s12 = sshll.u32 %s0, 4
      %s13 = int_to_ptr.hbm [resolvable:$true] %s12
      %s14 = sshll.u32 [#allocation2], 4
      %s15 = int_to_ptr.vmem [resolvable:$true] %s14
      %17 = dma.hbm_to_vmem [thread:$0]  %s13, 256, %s15, [#allocation3]
    $region5: #{tpu_custom_call.1} parent=1 // pred_fallthru
      _
    // Predicated region
    $region6: #{tpu_custom_call.1} parent=1 // pred_check
      _
    $region7: #{tpu_custom_call.1} parent=1 // pred_check_branch
      %19 = sbr.rel (0) target = $region9
    $region8: #{tpu_custom_call.1} parent=1 // pred_region
      %21 = dma.done [#allocation3], 256
    $region9: #{tpu_custom_call.1} parent=1 // pred_fallthru
      _
    %v22 = vld [vmem:[#allocation2] sm:$0xff]
    %v23 = vld [vmem:[#allocation2 + $0x8] sm:$0xff]
    %v24 = vmax.f32 %v22, %v23
    %25 = vmax.xlane.f32.xlu0 %v24
    %v26 = vpop.xlane.xlu0 %25
    %v27 = vmin.f32 %v22, %v23
    %28 = vmin.xlane.f32.xlu0 %v27
    %v29 = vpop.xlane.xlu0 %28
    %v30 = vadd.f32 %v26, %v29
    %v31 = vmul.f32 %v30, 0.5
    %vm32 = vcmask 7168
    %33 = vst.msk [vmem:[%s1] sm:$0xff] %vm32, %v31
    // Predicated region
    $region10: #{tpu_custom_call.1} parent=1 // pred_check
      _
    $region11: #{tpu_custom_call.1} parent=1 // pred_check_branch
      %35 = sbr.rel (0) target = $region13
    $region12: #{tpu_custom_call.1} parent=1 // pred_region
      _
    $region13: #{tpu_custom_call.1} parent=1 // pred_fallthru
      _
    // Predicated region
    $region14: #{tpu_custom_call.1} parent=1 // pred_check
      _
    $region15: #{tpu_custom_call.1} parent=1 // pred_check_branch
      %37 = sbr.rel (0) target = $region17
    $region16: #{tpu_custom_call.1} parent=1 // pred_region
      _
    $region17: #{tpu_custom_call.1} parent=1 // pred_fallthru
      _
    %38 = vsyncpa [#allocation3], 1

</llo_original>
